<compile_context>
chip_gen: v5e
topology: v5e:2x2
jax: 0.10.0
libtpu: 0.0.40
codegen_flags: <defaults>
</compile_context>

<pallas_src>
import jax
import jax.numpy as jnp
import numpy as np
from jax.experimental import pallas as pl
from jax.experimental.pallas import tpu as pltpu


def net_kernel(x_ref, w_ref, out_ref):
    """One batch tile: run all L layers, statically unrolled.

    x_ref:   (bm, D)      batch tile of the input
    w_ref:   (L, D, D)    full weight stack, already (in, out) layout
    out_ref: (L, bm, D)   per-layer activations for this batch tile
    """
    num_layers = w_ref.shape[0]
    act = x_ref[...].astype(jnp.float32)
    for l in range(num_layers):  # L static & small -> full unroll
        # Plain act @ W (weights pre-transposed on host): native MXU matmul,
        # f32 accumulation.
        act = jnp.dot(act, w_ref[l], preferred_element_type=jnp.float32)
        act = jnp.maximum(act, 0.0)  # ReLU
        out_ref[l] = act.astype(out_ref.dtype)


def _round_up(n, m):
    return ((n + m - 1) // m) * m


def prepare_weights(w):
    """One-time (init-path) conversion of PyTorch (out, in) Linear weights to
    (in, out) layout so the kernel contracts without any transpose."""
    return jnp.swapaxes(w, 1, 2)


def net_forward(x, w_t):
    """x: (B, D) float32; w_t: (L, D, D) weights in (in, out) layout
    (see prepare_weights).  Returns stacked per-layer activations (L, B, D)."""
    L, D, _ = w_t.shape
    B = x.shape[0]

    # Batch tile: one sublane tile at small B; cap at 256 (v6e/v7x MXU
    # height) once B scales.  D is not padded (full-array block dims).
    bm = min(_round_up(B, 8), 256)
    Bp = _round_up(B, bm)
    if Bp != B:
        x = jnp.pad(x, ((0, Bp - B), (0, 0)))

    # VMEM budget from actual buffer need (double-buffered blocks + headroom),
    # not the whole TC VMEM.
    itemsize = jnp.dtype(x.dtype).itemsize
    block_bytes = (bm * D + L * D * D + L * bm * D) * itemsize
    vmem_bytes = max(2 * block_bytes + (1 << 20), 8 << 20)

    stacked = pl.pallas_call(
        net_kernel,
        out_shape=jax.ShapeDtypeStruct((L, Bp, D), x.dtype),
        grid_spec=pltpu.PrefetchScalarGridSpec(
            num_scalar_prefetch=0,
            grid=(Bp // bm,),  # independent batch tiles
            in_specs=[
                pl.BlockSpec((bm, D), lambda i: (i, 0)),
                pl.BlockSpec((L, D, D), lambda i: (0, 0, 0)),
            ],
            out_specs=pl.BlockSpec((L, bm, D), lambda i: (0, i, 0)),
        ),
        compiler_params=pltpu.CompilerParams(
            # Batch tiles are independent -> v7x can shard across its 2 TCs;
            # harmless no-op on v5e/v6e (single TC).
            dimension_semantics=("parallel",),
            vmem_limit_bytes=vmem_bytes,
        ),
    )(x, w_t)

    # Single slice only if batch was padded; no per-layer list of slices.
    return stacked if Bp == B else stacked[:, :B, :]


net_forward_jit = jax.jit(net_forward)


def _reference(x, w):
    """Pure-numpy (exact f32) reference matching the PyTorch forward:
    per-layer ReLU(h @ W^T), PyTorch (out, in) weight layout."""
    h = np.asarray(x, dtype=np.float32)
    wn = np.asarray(w, dtype=np.float32)
    acts = []
    for l in range(wn.shape[0]):
        h = np.maximum(h @ wn[l].T, 0.0)
        acts.append(h)
    return np.stack(acts)


if __name__ == "__main__":
    dim = 32
    layers = 4
    batch = 8

    key = jax.random.PRNGKey(0)
    kx, kw = jax.random.split(key)
    x = jax.random.normal(kx, (batch, dim), dtype=jnp.float32)
    # Deterministic init at roughly torch.nn.Linear's Kaiming-uniform scale.
    bound = 1.0 / jnp.sqrt(dim)
    w = jax.random.uniform(kw, (layers, dim, dim),
                           minval=-bound, maxval=bound, dtype=jnp.float32)

    # One-time weight prep, kept out of the per-call path.
    w_t = jax.block_until_ready(prepare_weights(w))

    acts = net_forward_jit(x, w_t)          # (layers, batch, dim)
    acts = jax.block_until_ready(acts)

    ref = _reference(x, w)
    assert acts.shape == (layers, batch, dim)
    assert float(jnp.max(jnp.abs(acts - ref))) < 1e-4

    print("KERNEL_OK")
</pallas_src>

<mosaic_0001>
module attributes {stable_mosaic.version = 11 : i64} {
  func.func @net_kernel(%arg0: i32, %arg1: memref<8x32xf32, #tpu.memory_space<vmem>>, %arg2: memref<4x32x32xf32, #tpu.memory_space<vmem>>, %arg3: memref<4x8x32xf32, #tpu.memory_space<vmem>>) attributes {dimension_semantics = [#tpu.dimension_semantics<parallel>], iteration_bounds = array<i64: 1>, scalar_prefetch = 0 : i64, scratch_operands = 0 : i64, tpu.core_type = #tpu.core_type<tc>, window_params = [{transform_indices = @transform_0, window_bounds = array<i64: 8, 32>}, {pipeline_mode = #tpu.pipeline_mode<synchronous>, transform_indices = @transform_1, window_bounds = array<i64: 4, 32, 32>}, {transform_indices = @transform_2, window_bounds = array<i64: 4, 8, 32>}]} {
    %c0 = arith.constant 0 : index
    %c0_0 = arith.constant 0 : index
    %0 = vector.load %arg1[%c0, %c0_0] : memref<8x32xf32, #tpu.memory_space<vmem>>, vector<8x32xf32>
    %c0_1 = arith.constant 0 : index
    %c0_2 = arith.constant 0 : index
    %c0_3 = arith.constant 0 : index
    %1 = vector.load %arg2[%c0_1, %c0_2, %c0_3] : memref<4x32x32xf32, #tpu.memory_space<vmem>>, vector<1x32x32xf32>
    %2 = vector.shape_cast %1 : vector<1x32x32xf32> to vector<32x32xf32>
    %cst = arith.constant dense<0.000000e+00> : vector<8x32xf32>
    %3 = tpu.matmul %0, %2, %cst {dimension_numbers = #tpu.dot_dimension_numbers<[1], [0], [0], [1], [0, 0, 1, 1], [], []>} : vector<8x32xf32>, vector<32x32xf32>, vector<8x32xf32> -> vector<8x32xf32>
    %cst_4 = arith.constant 0.000000e+00 : f32
    %4 = vector.broadcast %cst_4 : f32 to vector<8x32xf32>
    %5 = arith.maximumf %3, %4 : vector<8x32xf32>
    %c0_5 = arith.constant 0 : index
    %c0_6 = arith.constant 0 : index
    %c0_7 = arith.constant 0 : index
    %6 = vector.load %arg3[%c0_5, %c0_6, %c0_7] : memref<4x8x32xf32, #tpu.memory_space<vmem>>, vector<1x8x32xf32>
    %7 = vector.shape_cast %6 : vector<1x8x32xf32> to vector<8x32xf32>
    %8 = vector.shape_cast %5 : vector<8x32xf32> to vector<1x8x32xf32>
    tpu.vector_store %arg3[%c0_5, %c0_6, %c0_7], %8 {strides = array<i32>} : memref<4x8x32xf32, #tpu.memory_space<vmem>>, vector<1x8x32xf32>,
    %c1 = arith.constant 1 : index
    %c0_8 = arith.constant 0 : index
    %c0_9 = arith.constant 0 : index
    %9 = vector.load %arg2[%c1, %c0_8, %c0_9] : memref<4x32x32xf32, #tpu.memory_space<vmem>>, vector<1x32x32xf32>
    %10 = vector.shape_cast %9 : vector<1x32x32xf32> to vector<32x32xf32>
    %cst_10 = arith.constant dense<0.000000e+00> : vector<8x32xf32>
    %11 = tpu.matmul %5, %10, %cst_10 {dimension_numbers = #tpu.dot_dimension_numbers<[1], [0], [0], [1], [0, 0, 1, 1], [], []>} : vector<8x32xf32>, vector<32x32xf32>, vector<8x32xf32> -> vector<8x32xf32>
    %cst_11 = arith.constant 0.000000e+00 : f32
    %12 = vector.broadcast %cst_11 : f32 to vector<8x32xf32>
    %13 = arith.maximumf %11, %12 : vector<8x32xf32>
    %c1_12 = arith.constant 1 : index
    %c0_13 = arith.constant 0 : index
    %c0_14 = arith.constant 0 : index
    %14 = vector.load %arg3[%c1_12, %c0_13, %c0_14] : memref<4x8x32xf32, #tpu.memory_space<vmem>>, vector<1x8x32xf32>
    %15 = vector.shape_cast %14 : vector<1x8x32xf32> to vector<8x32xf32>
    %16 = vector.shape_cast %13 : vector<8x32xf32> to vector<1x8x32xf32>
    tpu.vector_store %arg3[%c1_12, %c0_13, %c0_14], %16 {strides = array<i32>} : memref<4x8x32xf32, #tpu.memory_space<vmem>>, vector<1x8x32xf32>,
    %c2 = arith.constant 2 : index
    %c0_15 = arith.constant 0 : index
    %c0_16 = arith.constant 0 : index
    %17 = vector.load %arg2[%c2, %c0_15, %c0_16] : memref<4x32x32xf32, #tpu.memory_space<vmem>>, vector<1x32x32xf32>
    %18 = vector.shape_cast %17 : vector<1x32x32xf32> to vector<32x32xf32>
    %cst_17 = arith.constant dense<0.000000e+00> : vector<8x32xf32>
    %19 = tpu.matmul %13, %18, %cst_17 {dimension_numbers = #tpu.dot_dimension_numbers<[1], [0], [0], [1], [0, 0, 1, 1], [], []>} : vector<8x32xf32>, vector<32x32xf32>, vector<8x32xf32> -> vector<8x32xf32>
    %cst_18 = arith.constant 0.000000e+00 : f32
    %20 = vector.broadcast %cst_18 : f32 to vector<8x32xf32>
    %21 = arith.maximumf %19, %20 : vector<8x32xf32>
    %c2_19 = arith.constant 2 : index
    %c0_20 = arith.constant 0 : index
    %c0_21 = arith.constant 0 : index
    %22 = vector.load %arg3[%c2_19, %c0_20, %c0_21] : memref<4x8x32xf32, #tpu.memory_space<vmem>>, vector<1x8x32xf32>
    %23 = vector.shape_cast %22 : vector<1x8x32xf32> to vector<8x32xf32>
    %24 = vector.shape_cast %21 : vector<8x32xf32> to vector<1x8x32xf32>
    tpu.vector_store %arg3[%c2_19, %c0_20, %c0_21], %24 {strides = array<i32>} : memref<4x8x32xf32, #tpu.memory_space<vmem>>, vector<1x8x32xf32>,
    %c3 = arith.constant 3 : index
    %c0_22 = arith.constant 0 : index
    %c0_23 = arith.constant 0 : index
    %25 = vector.load %arg2[%c3, %c0_22, %c0_23] : memref<4x32x32xf32, #tpu.memory_space<vmem>>, vector<1x32x32xf32>
    %26 = vector.shape_cast %25 : vector<1x32x32xf32> to vector<32x32xf32>
    %cst_24 = arith.constant dense<0.000000e+00> : vector<8x32xf32>
    %27 = tpu.matmul %21, %26, %cst_24 {dimension_numbers = #tpu.dot_dimension_numbers<[1], [0], [0], [1], [0, 0, 1, 1], [], []>} : vector<8x32xf32>, vector<32x32xf32>, vector<8x32xf32> -> vector<8x32xf32>
    %cst_25 = arith.constant 0.000000e+00 : f32
    %28 = vector.broadcast %cst_25 : f32 to vector<8x32xf32>
    %29 = arith.maximumf %27, %28 : vector<8x32xf32>
    %c3_26 = arith.constant 3 : index
    %c0_27 = arith.constant 0 : index
    %c0_28 = arith.constant 0 : index
    %30 = vector.load %arg3[%c3_26, %c0_27, %c0_28] : memref<4x8x32xf32, #tpu.memory_space<vmem>>, vector<1x8x32xf32>
    %31 = vector.shape_cast %30 : vector<1x8x32xf32> to vector<8x32xf32>
    %32 = vector.shape_cast %29 : vector<8x32xf32> to vector<1x8x32xf32>
    tpu.vector_store %arg3[%c3_26, %c0_27, %c0_28], %32 {strides = array<i32>} : memref<4x8x32xf32, #tpu.memory_space<vmem>>, vector<1x8x32xf32>,
    return
  }
  func.func @transform_0(%arg0: i32) -> (i32, i32) {
    %c0_i32 = arith.constant 0 : i32
    %c0_i32_0 = arith.constant 0 : i32
    return %arg0, %c0_i32 : i32, i32
  }
  func.func @transform_1(%arg0: i32) -> (i32, i32, i32) {
    %c0_i32 = arith.constant 0 : i32
    %c0_i32_0 = arith.constant 0 : i32
    %c0_i32_1 = arith.constant 0 : i32
    %c0_i32_2 = arith.constant 0 : i32
    return %c0_i32, %c0_i32_0, %c0_i32_1 : i32, i32, i32
  }
  func.func @transform_2(%arg0: i32) -> (i32, i32, i32) {
    %c0_i32 = arith.constant 0 : i32
    %c0_i32_0 = arith.constant 0 : i32
    %c0_i32_1 = arith.constant 0 : i32
    return %c0_i32, %arg0, %c0_i32_0 : i32, i32, i32
  }
}

</mosaic_0001>

<llo_original>
// kernel: net_forward.1
$region0: #{net_forward.1}
  #allocation0 [shape = 'u32[]', space=smem, size = 0x4, offset = 0x4, fixed_abs, tag = 'smem constant byte address 0x4 - core index']
  #allocation1 [shape = 'u32[72,128]{1,0:T(1,128)}', space=vmem, size = 0x9000, scoped, tag = 'internal scratch']
  %s0 = inlined_call_operand.hbm [shape: f32[8,32], index: 0, kind: input, shape index: {}]
  %s1 = inlined_call_operand.hbm [shape: f32[4,32,32], index: 1, kind: input, shape index: {}]
  %s2 = inlined_call_operand.hbm [shape: f32[4,8,32], index: 2, kind: output, shape index: {}]
  %s3 = sld [smem:[#allocation0]]
  $region26: #{net_forward.1} parent=0
    _
  %s5 = ssub.s32 1, %s3
  %s6 = scalar_select 0, %s5, %s3
  $region1: #{net_forward.1} parent=0
    #allocation2 [shape = 'u8[4096]{0}', space=vmem, size = 0x1000, scoped, tag = 'input window, operand 0, single buffered']
    #allocation3 [shape = 's32[1]{0}', space=sflag, size = 0x4, scoped, tag = 'scoped memory for net_forward.1']
    #allocation4 [shape = 's32[1]{0}', space=sflag, size = 0x4, scoped, tag = 'scoped memory for net_forward.1']
    #allocation5 [shape = 'u8[65536]{0}', space=vmem, size = 0x10000, scoped, tag = 'input window, operand 1, single buffered']
    #allocation6 [shape = 's32[1]{0}', space=sflag, size = 0x4, scoped, tag = 'scoped memory for net_forward.1']
    #allocation7 [shape = 'u8[16384]{0}', space=vmem, size = 0x4000, scoped, tag = 'output window, operand 0, single buffered']
    %7 = vsyncpa [#allocation3], 0
    %8 = vsyncpa [#allocation6], 0
    %9 = vsyncpa [#allocation4], 0
    // Predicated region
    $region2: #{net_forward.1} parent=1 // pred_check
      _
    $region3: #{net_forward.1} parent=1 // pred_check_branch
      %11 = sbr.rel (0) target = $region5
    $region4: #{net_forward.1} parent=1 // pred_region
      %13 = vsyncadd [#allocation3], 0
      %s15 = sshll.u32 %s0, 4
      %s16 = int_to_ptr.hbm [resolvable:$true] %s15
      %s17 = sshll.u32 [#allocation2], 4
      %s18 = int_to_ptr.vmem [resolvable:$true] %s17
      %20 = dma.hbm_to_vmem [thread:$0]  %s16, 128, %s18, [#allocation3]
    $region5: #{net_forward.1} parent=1 // pred_fallthru
      _
    // Predicated region
    $region6: #{net_forward.1} parent=1 // pred_check
      _
    $region7: #{net_forward.1} parent=1 // pred_check_branch
      %22 = sbr.rel (0) target = $region9
    $region8: #{net_forward.1} parent=1 // pred_region
      %24 = vsyncadd [#allocation6], 0
      %s25 = sshll.u32 %s1, 4
      %s26 = int_to_ptr.hbm [resolvable:$true] %s25
      %s27 = sshll.u32 [#allocation5], 4
      %s28 = int_to_ptr.vmem [resolvable:$true] %s27
      %33 = dma.hbm_to_vmem [thread:$0]  %s26, 2048, %s28, [#allocation6], 128, 128, 8
    $region9: #{net_forward.1} parent=1 // pred_fallthru
      _
    // Predicated region
    $region10: #{net_forward.1} parent=1 // pred_check
      _
    $region11: #{net_forward.1} parent=1 // pred_check_branch
      %35 = sbr.rel (0) target = $region13
    $region12: #{net_forward.1} parent=1 // pred_region
      %37 = dma.done [#allocation3], 128
    $region13: #{net_forward.1} parent=1 // pred_fallthru
      _
    // Predicated region
    $region14: #{net_forward.1} parent=1 // pred_check
      _
    $region15: #{net_forward.1} parent=1 // pred_check_branch
      %39 = sbr.rel (0) target = $region17
    $region16: #{net_forward.1} parent=1 // pred_region
      %41 = dma.done [#allocation6], 2048
    $region17: #{net_forward.1} parent=1 // pred_fallthru
      _
    %v42 = vld [vmem:[#allocation2] sm:$0xff]
    %v43 = vld [vmem:[#allocation5] sm:$0xff]
    %v44 = vld [vmem:[#allocation5 + $0x8] sm:$0xff]
    %v45 = vld [vmem:[#allocation5 + $0x10] sm:$0xff]
    %v46 = vld [vmem:[#allocation5 + $0x18] sm:$0xff]
    %vm47 = vcmask 261120
    %v49 = vsel %vm47, %v42, 0
    %51 = vmatpush.msra.mxu0 0.0
    %52 = vmatpush.msra.mxu0 0.0
    %53 = vmatpush.msra.mxu0 0.0
    %54 = vmatpush.msra.mxu0 0.0
    %55 = vmatpush.msra.mxu0 0.0
    %56 = vmatpush.msra.mxu0 0.0
    %57 = vmatpush.msra.mxu0 0.0
    %58 = vmatpush.msra.mxu0 0.0
    %59 = vmatpush.msra.mxu0 0.0
    %60 = vmatpush.msra.mxu0 0.0
    %61 = vmatpush.msra.mxu0 0.0
    %62 = vmatpush.msra.mxu0 0.0
    %63 = vmatpush.msra.mxu0 %v46
    %64 = vmatpush.msra.mxu0 %v45
    %65 = vmatpush.msra.mxu0 %v44
    %66 = vmatpush.msra.mxu0 %v43
    %67 = vmatmul.f32.gmra.mxu0 %v49
    %v68 = vpop.f32.mrf.mxu0
    %v69 = vadd.f32 0.0, %v68
    %70 = vdwg.mxu0
    %v71 = vmax.f32 %v69, 0.0
    %72 = vst.msk [vmem:[#allocation7] sm:$0xff] %vm47, %v71
    %s73 = scalar_lea.vmem [#allocation5], 32
    %v74 = vld [vmem:[%s73] sm:$0xff]
    %v75 = vld [vmem:[%s73 + $0x8] sm:$0xff]
    %v76 = vld [vmem:[%s73 + $0x10] sm:$0xff]
    %v77 = vld [vmem:[%s73 + $0x18] sm:$0xff]
    %v79 = vsel %vm47, %v71, 0
    %81 = vmatpush.msra.mxu0 0.0
    %82 = vmatpush.msra.mxu0 0.0
    %83 = vmatpush.msra.mxu0 0.0
    %84 = vmatpush.msra.mxu0 0.0
    %85 = vmatpush.msra.mxu0 0.0
    %86 = vmatpush.msra.mxu0 0.0
    %87 = vmatpush.msra.mxu0 0.0
    %88 = vmatpush.msra.mxu0 0.0
    %89 = vmatpush.msra.mxu0 0.0
    %90 = vmatpush.msra.mxu0 0.0
    %91 = vmatpush.msra.mxu0 0.0
    %92 = vmatpush.msra.mxu0 0.0
    %93 = vmatpush.msra.mxu0 %v77
    %94 = vmatpush.msra.mxu0 %v76
    %95 = vmatpush.msra.mxu0 %v75
    %96 = vmatpush.msra.mxu0 %v74
    %97 = vmatmul.f32.gmra.mxu0 %v79
    %v98 = vpop.f32.mrf.mxu0
    %v99 = vadd.f32 0.0, %v98
    %100 = vdwg.mxu0
    %v101 = vmax.f32 %v99, 0.0
    %s102 = scalar_lea.vmem [#allocation7], 8
    %103 = vst.msk [vmem:[%s102] sm:$0xff] %vm47, %v101
    %s104 = scalar_lea.vmem [#allocation5], 64
    %v105 = vld [vmem:[%s104] sm:$0xff]
    %v106 = vld [vmem:[%s104 + $0x8] sm:$0xff]
    %v107 = vld [vmem:[%s104 + $0x10] sm:$0xff]
    %v108 = vld [vmem:[%s104 + $0x18] sm:$0xff]
    %v110 = vsel %vm47, %v101, 0
    %112 = vmatpush.msra.mxu0 0.0
    %113 = vmatpush.msra.mxu0 0.0
    %114 = vmatpush.msra.mxu0 0.0
    %115 = vmatpush.msra.mxu0 0.0
    %116 = vmatpush.msra.mxu0 0.0
    %117 = vmatpush.msra.mxu0 0.0
    %118 = vmatpush.msra.mxu0 0.0
    %119 = vmatpush.msra.mxu0 0.0
    %120 = vmatpush.msra.mxu0 0.0
    %121 = vmatpush.msra.mxu0 0.0
    %122 = vmatpush.msra.mxu0 0.0
    %123 = vmatpush.msra.mxu0 0.0
    %124 = vmatpush.msra.mxu0 %v108
    %125 = vmatpush.msra.mxu0 %v107
    %126 = vmatpush.msra.mxu0 %v106
    %127 = vmatpush.msra.mxu0 %v105
    %128 = vmatmul.f32.gmra.mxu0 %v110
    %v129 = vpop.f32.mrf.mxu0
    %v130 = vadd.f32 0.0, %v129
    %131 = vdwg.mxu0
    %v132 = vmax.f32 %v130, 0.0
    %s133 = scalar_lea.vmem [#allocation7], 16
    %134 = vst.msk [vmem:[%s133] sm:$0xff] %vm47, %v132
    %s135 = scalar_lea.vmem [#allocation5], 96
    %v136 = vld [vmem:[%s135] sm:$0xff]
    %v137 = vld [vmem:[%s135 + $0x8] sm:$0xff]
    %v138 = vld [vmem:[%s135 + $0x10] sm:$0xff]
    %v139 = vld [vmem:[%s135 + $0x18] sm:$0xff]
    %v141 = vsel %vm47, %v132, 0
    %143 = vmatpush.msra.mxu0 0.0
    %144 = vmatpush.msra.mxu0 0.0
    %145 = vmatpush.msra.mxu0 0.0
    %146 = vmatpush.msra.mxu0 0.0
    %147 = vmatpush.msra.mxu0 0.0
    %148 = vmatpush.msra.mxu0 0.0
    %149 = vmatpush.msra.mxu0 0.0
    %150 = vmatpush.msra.mxu0 0.0
    %151 = vmatpush.msra.mxu0 0.0
    %152 = vmatpush.msra.mxu0 0.0
    %153 = vmatpush.msra.mxu0 0.0
    %154 = vmatpush.msra.mxu0 0.0
    %155 = vmatpush.msra.mxu0 %v139
    %156 = vmatpush.msra.mxu0 %v138
    %157 = vmatpush.msra.mxu0 %v137
    %158 = vmatpush.msra.mxu0 %v136
    %159 = vmatmul.f32.gmra.mxu0 %v141
    %v160 = vpop.f32.mrf.mxu0
    %v161 = vadd.f32 0.0, %v160
    %162 = vdwg.mxu0
    %v163 = vmax.f32 %v161, 0.0
    %s164 = scalar_lea.vmem [#allocation7], 24
    %165 = vst.msk [vmem:[%s164] sm:$0xff] %vm47, %v163
    // Predicated region
    $region18: #{net_forward.1} parent=1 // pred_check
      _
    $region19: #{net_forward.1} parent=1 // pred_check_branch
      %167 = sbr.rel (0) target = $region21
    $region20: #{net_forward.1} parent=1 // pred_region
      %169 = vsyncadd [#allocation4], 0
      %s170 = sshll.u32 [#allocation7], 4
      %s171 = int_to_ptr.vmem [resolvable:$true] %s170
      %s172 = sshll.u32 %s2, 4
      %s173 = int_to_ptr.hbm [resolvable:$true] %s172
      %178 = dma.vmem_to_hbm [thread:$0]  %s171, 512, %s173, [#allocation4], 128, 128, 8
    $region21: #{net_forward.1} parent=1 // pred_fallthru
      _
    // Predicated region
    $region22: #{net_forward.1} parent=1 // pred_check
      _
    $region23: #{net_forward.1} parent=1 // pred_check_branch
      %180 = sbr.rel (0) target = $region25
    $region24: #{net_forward.1} parent=1 // pred_region
      %182 = dma.done [#allocation4], 512
    $region25: #{net_forward.1} parent=1 // pred_fallthru
      _
    %183 = vsyncpa [#allocation3], 1
    %184 = vsyncpa [#allocation6], 1
    %185 = vsyncpa [#allocation4], 1

</llo_original>
